<compile_context>
chip_gen: v6e
topology: v6e:2x2x1
jax: 0.10.0
libtpu: 0.0.40
codegen_flags: <defaults>
</compile_context>

<pallas_src>
import functools
import math

import jax
import jax.numpy as jnp
from jax import lax
from jax.experimental import pallas as pl
from jax.experimental.pallas import tpu as pltpu

TEMPERATURE = 0.1
INV_T = 1.0 / TEMPERATURE
DIAG_FILL = -1e-08
NORM_EPS = 1e-12                      # torch F.normalize default eps
LOGIT_MAX = INV_T                     # |cos sim| <= 1  =>  scaled logits <= 1/T
DIAG_EXP = math.exp(DIAG_FILL * INV_T - LOGIT_MAX)


def _round_up(x, m):
    return (x + m - 1) // m * m


def _contrastive_loss_kernel(q_ref, it_ref, out_ref,
                             p_scr, rs_scr, cs_scr, plane_scr, acc_scr,
                             *, n, bn, padded, mxu_dtype):
    i = pl.program_id(0)              # row block (outer)
    j = pl.program_id(1)              # col block (inner)
    nbi = pl.num_programs(0)
    nbj = pl.num_programs(1)

    f32 = jnp.float32
    m_const = f32(LOGIT_MAX)
    inv_t = f32(INV_T)

    # ---------------- init accumulators ----------------
    @pl.when(jnp.logical_and(i == 0, j == 0))
    def _():
        acc_scr[...] = jnp.zeros_like(acc_scr)
        cs_scr[...] = jnp.zeros_like(cs_scr)

    @pl.when(j == 0)
    def _():
        rs_scr[...] = jnp.zeros_like(rs_scr)

    # ---------------- normalize tiles (f32, rsqrt) ----------------
    q = q_ref[...].astype(f32)                               # (bn, C) query rows
    it = it_ref[...].astype(f32)                              # (bn, C) item cols
    eps2 = f32(NORM_EPS * NORM_EPS)
    qn = q * lax.rsqrt(jnp.maximum(jnp.sum(q * q, axis=1, keepdims=True), eps2))
    itn = it * lax.rsqrt(jnp.maximum(jnp.sum(it * it, axis=1, keepdims=True), eps2))

    # ---------------- similarity tile on the MXU (NT contraction) -------------
    sim = lax.dot_general(qn.astype(mxu_dtype), itn.astype(mxu_dtype),
                          dimension_numbers=(((1,), (1,)), ((), ())),
                          preferred_element_type=f32)         # (bn, bn)

    # exp with a constant max (numerically safe: exponent in [-2/T, 0])
    e = jnp.exp(sim * inv_t - m_const)                        # (bn, bn)

    if padded:
        row_ok = (i * bn + lax.broadcasted_iota(jnp.int32, (bn, 1), 0)) < n
        col_ok = (j * bn + lax.broadcasted_iota(jnp.int32, (1, bn), 1)) < n
        e = jnp.where(jnp.logical_and(row_ok, col_ok), e, f32(0.0))

    # ---------------- two-way online accumulation from one tile ---------------
    rs_scr[...] += jnp.sum(e, axis=1, keepdims=True)          # (bn, 1) col-loss path
    cs_scr[j] = cs_scr[j] + jnp.sum(e, axis=0, keepdims=True)  # (1, bn) row-loss path

    # ---------------- diagonal tile only: pos extraction + diag fill ----------
    @pl.when(i == j)
    def _():
        eye = (lax.broadcasted_iota(jnp.int32, (bn, bn), 0)
               == lax.broadcasted_iota(jnp.int32, (bn, bn), 1))
        sim_d = jnp.where(eye, sim, f32(0.0))
        # pos = diag(sim); store scaled pos in both layouts (no transposes).
        p_scr[...] = jnp.sum(sim_d, axis=1, keepdims=True) * inv_t      # (bn, 1)
        plane_scr[j] = jnp.sum(sim_d, axis=0, keepdims=True) * inv_t    # (1, bn)
        # Replace the diagonal exp contribution with exp(DIAG_FILL/T - M).
        e_d = jnp.where(eye, e, f32(0.0))
        diag_r = jnp.sum(e_d, axis=1, keepdims=True)                    # (bn, 1)
        diag_c = jnp.sum(e_d, axis=0, keepdims=True)                    # (1, bn)
        if padded:
            row_ok = (i * bn + lax.broadcasted_iota(jnp.int32, (bn, 1), 0)) < n
            col_ok = (j * bn + lax.broadcasted_iota(jnp.int32, (1, bn), 1)) < n
            fill_r = jnp.where(row_ok, f32(DIAG_EXP), f32(0.0))
            fill_c = jnp.where(col_ok, f32(DIAG_EXP), f32(0.0))
        else:
            fill_r = f32(DIAG_EXP)
            fill_c = f32(DIAG_EXP)
        rs_scr[...] += fill_r - diag_r
        cs_scr[j] = cs_scr[j] + (fill_c - diag_c)

    # ---------------- finalize col-loss for this row block (row sweep done) ---
    @pl.when(j == nbj - 1)
    def _():
        p = p_scr[...]                                                  # (bn, 1)
        lse = m_const + jnp.log(jnp.exp(p - m_const) + rs_scr[...])
        term = lse - p
        if padded:
            row_ok = (i * bn + lax.broadcasted_iota(jnp.int32, (bn, 1), 0)) < n
            term = jnp.where(row_ok, term, f32(0.0))
        acc_scr[...] = acc_scr[...] + jnp.sum(term)

    # ---------------- finalize row-loss for this col block (all rows done) ----
    @pl.when(i == nbi - 1)
    def _():
        p = plane_scr[j]                                                # (1, bn)
        lse = m_const + jnp.log(jnp.exp(p - m_const) + cs_scr[j])
        term = lse - p
        if padded:
            col_ok = (j * bn + lax.broadcasted_iota(jnp.int32, (1, bn), 1)) < n
            term = jnp.where(col_ok, term, f32(0.0))
        acc_scr[...] = acc_scr[...] + jnp.sum(term)

    # ---------------- last grid step: average over both CE means --------------
    @pl.when(jnp.logical_and(i == nbi - 1, j == nbj - 1))
    def _():
        out_ref[...] = acc_scr[...] * f32(0.5 / n)


def contrastive_loss(query_rep, item_rep, *, block_n=None, vmem_limit_bytes=None):
    """Returns (loss, mask_ratio) matching ConstrastiveLoss.forward defaults."""
    assert query_rep.shape == item_rep.shape and query_rep.ndim == 2
    n, c = query_rep.shape

    # 256-aligned tiles for v6e/v7x MXU; small N collapses to a single tile.
    if block_n is None:
        block_n = min(256, _round_up(n, 8))
    block_n = max(8, _round_up(block_n, 8))
    n_pad = _round_up(n, block_n)
    nb = n_pad // block_n
    padded = n_pad != n

    q, it = query_rep, item_rep
    if padded:
        q = jnp.pad(q, ((0, n_pad - n), (0, 0)))
        it = jnp.pad(it, ((0, n_pad - n), (0, 0)))

    # bf16 inputs -> bf16 MXU operands with f32 accumulation; f32 stays f32.
    mxu_dtype = jnp.bfloat16 if query_rep.dtype == jnp.bfloat16 else jnp.float32

    kernel = functools.partial(_contrastive_loss_kernel,
                               n=n, bn=block_n, padded=padded, mxu_dtype=mxu_dtype)

    loss = pl.pallas_call(
        kernel,
        out_shape=jax.ShapeDtypeStruct((1, 1), jnp.float32),
        grid_spec=pltpu.PrefetchScalarGridSpec(
            num_scalar_prefetch=0,
            grid=(nb, nb),
            in_specs=[
                pl.BlockSpec((block_n, c), lambda i, j: (i, 0)),   # query row tile
                pl.BlockSpec((block_n, c), lambda i, j: (j, 0)),   # item col tile
            ],
            out_specs=pl.BlockSpec((1, 1), lambda i, j: (0, 0)),
            scratch_shapes=[
                pltpu.VMEM((block_n, 1), jnp.float32),       # p_scr: pos/T (row layout)
                pltpu.VMEM((block_n, 1), jnp.float32),       # rs_scr: row sum-exp
                pltpu.VMEM((nb, 1, block_n), jnp.float32),   # cs_scr: col sum-exp per col block
                pltpu.VMEM((nb, 1, block_n), jnp.float32),   # plane_scr: pos/T (lane layout)
                pltpu.VMEM((1, 1), jnp.float32),             # acc_scr: scalar loss accumulator
            ],
        ),
        compiler_params=pltpu.CompilerParams(
            # Both grid axes carry cross-iteration accumulator state
            # (row sums over j, column sums / scalar loss over i), so they
            # must run sequentially.
            dimension_semantics=("arbitrary", "arbitrary"),
            vmem_limit_bytes=vmem_limit_bytes,
        ),
    )(q, it)
    # mask_ratio is 0 on the no-margin path.
    return loss[0, 0], 0.0


def _reference_loss(query_rep, item_rep):
    # Pure-JAX reference of the same forward (for correctness check).
    q = query_rep / jnp.maximum(
        jnp.linalg.norm(query_rep, axis=1, keepdims=True), NORM_EPS)
    i = item_rep / jnp.maximum(
        jnp.linalg.norm(item_rep, axis=1, keepdims=True), NORM_EPS)
    pos = jnp.sum(q * i, axis=1, keepdims=True)
    sim = q @ i.T
    n = sim.shape[0]
    eye = jnp.eye(n, dtype=bool)
    neg_col = jnp.where(eye, DIAG_FILL, sim)
    neg_row = neg_col.T
    logits_col = jnp.concatenate([pos, neg_col], axis=1) / TEMPERATURE
    logits_row = jnp.concatenate([pos, neg_row], axis=1) / TEMPERATURE

    def ce0(x):
        return jnp.mean(jax.nn.logsumexp(x, axis=1) - x[:, 0])

    return (ce0(logits_col) + ce0(logits_row)) / 2.0


if __name__ == "__main__":
    key = jax.random.PRNGKey(0)
    k0, k1, k2, k3 = jax.random.split(key, 4)

    # Case 1: single-tile path (N=8, C=32).
    N, C = 8, 32
    query = jax.random.normal(k0, (N, C), dtype=jnp.float32)
    item = jax.random.normal(k1, (N, C), dtype=jnp.float32)
    loss, mask_ratio = contrastive_loss(query, item)
    loss = jax.block_until_ready(loss)
    ref = jax.block_until_ready(_reference_loss(query, item))
    assert jnp.allclose(loss, ref, atol=1e-5, rtol=1e-5), (loss, ref)

    # Case 2: tiled + padded path (N=40 padded to 48, 3x3 grid of 16-wide tiles).
    N2, C2 = 40, 32
    query2 = jax.random.normal(k2, (N2, C2), dtype=jnp.float32)
    item2 = jax.random.normal(k3, (N2, C2), dtype=jnp.float32)
    loss2, _ = contrastive_loss(query2, item2, block_n=16)
    loss2 = jax.block_until_ready(loss2)
    ref2 = jax.block_until_ready(_reference_loss(query2, item2))
    assert jnp.allclose(loss2, ref2, atol=1e-5, rtol=1e-5), (loss2, ref2)

    print("KERNEL_OK")
</pallas_src>

<mosaic_0001>
module attributes {stable_mosaic.version = 11 : i64} {
  func.func @_contrastive_loss_kernel(%arg0: i32, %arg1: i32, %arg2: memref<8x32xf32, #tpu.memory_space<vmem>>, %arg3: memref<8x32xf32, #tpu.memory_space<vmem>>, %arg4: memref<1x1xf32, #tpu.memory_space<vmem>>, %arg5: memref<8x1xf32, #tpu.memory_space<vmem>>, %arg6: memref<8x1xf32, #tpu.memory_space<vmem>>, %arg7: memref<1x1x8xf32, #tpu.memory_space<vmem>>, %arg8: memref<1x1x8xf32, #tpu.memory_space<vmem>>, %arg9: memref<1x1xf32, #tpu.memory_space<vmem>>) attributes {dimension_semantics = [#tpu.dimension_semantics<arbitrary>, #tpu.dimension_semantics<arbitrary>], iteration_bounds = array<i64: 1, 1>, scalar_prefetch = 0 : i64, scratch_operands = 5 : i64, tpu.core_type = #tpu.core_type<tc>, window_params = [{transform_indices = @transform_0, window_bounds = array<i64: 8, 32>}, {transform_indices = @transform_1, window_bounds = array<i64: 8, 32>}, {pipeline_mode = #tpu.pipeline_mode<synchronous>, transform_indices = @transform_2, window_bounds = array<i64: 1, 1>}]} {
    %c0_i32 = arith.constant 0 : i32
    %0 = arith.cmpi eq, %arg0, %c0_i32 : i32
    %c0_i32_0 = arith.constant 0 : i32
    %1 = arith.cmpi eq, %arg1, %c0_i32_0 : i32
    %2 = arith.andi %0, %1 : i1
    %3 = arith.extui %2 : i1 to i32
    %c0_i32_1 = arith.constant 0 : i32
    %4 = arith.cmpi ne, %3, %c0_i32_1 : i32
    scf.if %4 {
      %cst_34 = arith.constant 0.000000e+00 : f32
      %61 = vector.broadcast %cst_34 : f32 to vector<1x1xf32>
      %c0_35 = arith.constant 0 : index
      %c0_36 = arith.constant 0 : index
      %62 = vector.load %arg9[%c0_35, %c0_36] : memref<1x1xf32, #tpu.memory_space<vmem>>, vector<1x1xf32>
      tpu.vector_store %arg9[%c0_35, %c0_36], %61 {strides = array<i32>} : memref<1x1xf32, #tpu.memory_space<vmem>>, vector<1x1xf32>,
      %cst_37 = arith.constant 0.000000e+00 : f32
      %63 = vector.broadcast %cst_37 : f32 to vector<1x1x8xf32>
      %c0_38 = arith.constant 0 : index
      %c0_39 = arith.constant 0 : index
      %c0_40 = arith.constant 0 : index
      %64 = vector.load %arg7[%c0_38, %c0_39, %c0_40] : memref<1x1x8xf32, #tpu.memory_space<vmem>>, vector<1x1x8xf32>
      tpu.vector_store %arg7[%c0_38, %c0_39, %c0_40], %63 {strides = array<i32>} : memref<1x1x8xf32, #tpu.memory_space<vmem>>, vector<1x1x8xf32>,
    } else {
    }
    %c0_i32_2 = arith.constant 0 : i32
    %5 = arith.cmpi eq, %arg1, %c0_i32_2 : i32
    %6 = arith.extui %5 : i1 to i32
    %c0_i32_3 = arith.constant 0 : i32
    %7 = arith.cmpi ne, %6, %c0_i32_3 : i32
    scf.if %7 {
      %cst_34 = arith.constant 0.000000e+00 : f32
      %61 = vector.broadcast %cst_34 : f32 to vector<8x1xf32>
      %c0_35 = arith.constant 0 : index
      %c0_36 = arith.constant 0 : index
      %62 = vector.load %arg6[%c0_35, %c0_36] : memref<8x1xf32, #tpu.memory_space<vmem>>, vector<8x1xf32>
      tpu.vector_store %arg6[%c0_35, %c0_36], %61 {strides = array<i32>} : memref<8x1xf32, #tpu.memory_space<vmem>>, vector<8x1xf32>,
    } else {
    }
    %c0 = arith.constant 0 : index
    %c0_4 = arith.constant 0 : index
    %8 = vector.load %arg2[%c0, %c0_4] : memref<8x32xf32, #tpu.memory_space<vmem>>, vector<8x32xf32>
    %c0_5 = arith.constant 0 : index
    %c0_6 = arith.constant 0 : index
    %9 = vector.load %arg3[%c0_5, %c0_6] : memref<8x32xf32, #tpu.memory_space<vmem>>, vector<8x32xf32>
    %10 = arith.mulf %8, %8 : vector<8x32xf32>
    %cst = arith.constant dense<0.000000e+00> : vector<8xf32>
    %11 = vector.multi_reduction <add>, %10, %cst [1] : vector<8x32xf32> to vector<8xf32>
    %12 = vector.shape_cast %11 : vector<8xf32> to vector<8x1xf32>
    %cst_7 = arith.constant 1.000000e-24 : f32
    %13 = vector.broadcast %cst_7 : f32 to vector<8x1xf32>
    %14 = arith.maximumf %12, %13 : vector<8x1xf32>
    %15 = math.rsqrt %14 : vector<8x1xf32>
    %16 = vector.broadcast %15 : vector<8x1xf32> to vector<8x32xf32>
    %17 = arith.mulf %8, %16 : vector<8x32xf32>
    %18 = arith.mulf %9, %9 : vector<8x32xf32>
    %cst_8 = arith.constant dense<0.000000e+00> : vector<8xf32>
    %19 = vector.multi_reduction <add>, %18, %cst_8 [1] : vector<8x32xf32> to vector<8xf32>
    %20 = vector.shape_cast %19 : vector<8xf32> to vector<8x1xf32>
    %cst_9 = arith.constant 1.000000e-24 : f32
    %21 = vector.broadcast %cst_9 : f32 to vector<8x1xf32>
    %22 = arith.maximumf %20, %21 : vector<8x1xf32>
    %23 = math.rsqrt %22 : vector<8x1xf32>
    %24 = vector.broadcast %23 : vector<8x1xf32> to vector<8x32xf32>
    %25 = arith.mulf %9, %24 : vector<8x32xf32>
    %cst_10 = arith.constant dense<0.000000e+00> : vector<8x8xf32>
    %26 = tpu.matmul %17, %25, %cst_10 {dimension_numbers = #tpu.dot_dimension_numbers<[1], [1], [0], [0], [0, 0, 1, 0], [], []>} : vector<8x32xf32>, vector<8x32xf32>, vector<8x8xf32> -> vector<8x8xf32>
    %cst_11 = arith.constant 1.000000e+01 : f32
    %27 = vector.broadcast %cst_11 : f32 to vector<8x8xf32>
    %28 = arith.mulf %26, %27 : vector<8x8xf32>
    %cst_12 = arith.constant 1.000000e+01 : f32
    %29 = vector.broadcast %cst_12 : f32 to vector<8x8xf32>
    %30 = arith.subf %28, %29 : vector<8x8xf32>
    %31 = math.exp %30 : vector<8x8xf32>
    %c0_13 = arith.constant 0 : index
    %c0_14 = arith.constant 0 : index
    %32 = vector.load %arg6[%c0_13, %c0_14] : memref<8x1xf32, #tpu.memory_space<vmem>>, vector<8x1xf32>
    %cst_15 = arith.constant dense<0.000000e+00> : vector<8xf32>
    %33 = vector.multi_reduction <add>, %31, %cst_15 [1] : vector<8x8xf32> to vector<8xf32>
    %34 = vector.shape_cast %33 : vector<8xf32> to vector<8x1xf32>
    %35 = arith.addf %32, %34 : vector<8x1xf32>
    %c0_16 = arith.constant 0 : index
    %c0_17 = arith.constant 0 : index
    %36 = vector.load %arg6[%c0_16, %c0_17] : memref<8x1xf32, #tpu.memory_space<vmem>>, vector<8x1xf32>
    tpu.vector_store %arg6[%c0_16, %c0_17], %35 {strides = array<i32>} : memref<8x1xf32, #tpu.memory_space<vmem>>, vector<8x1xf32>,
    %37 = arith.index_cast %arg1 : i32 to index
    %c0_18 = arith.constant 0 : index
    %c0_19 = arith.constant 0 : index
    %38 = vector.load %arg7[%37, %c0_18, %c0_19] : memref<1x1x8xf32, #tpu.memory_space<vmem>>, vector<1x1x8xf32>
    %39 = vector.shape_cast %38 : vector<1x1x8xf32> to vector<1x8xf32>
    %cst_20 = arith.constant dense<0.000000e+00> : vector<8xf32>
    %40 = vector.multi_reduction <add>, %31, %cst_20 [0] : vector<8x8xf32> to vector<8xf32>
    %41 = vector.shape_cast %40 : vector<8xf32> to vector<1x8xf32>
    %42 = arith.addf %39, %41 : vector<1x8xf32>
    %43 = arith.index_cast %arg1 : i32 to index
    %c0_21 = arith.constant 0 : index
    %c0_22 = arith.constant 0 : index
    %44 = vector.load %arg7[%43, %c0_21, %c0_22] : memref<1x1x8xf32, #tpu.memory_space<vmem>>, vector<1x1x8xf32>
    %45 = vector.shape_cast %44 : vector<1x1x8xf32> to vector<1x8xf32>
    %46 = vector.shape_cast %42 : vector<1x8xf32> to vector<1x1x8xf32>
    tpu.vector_store %arg7[%43, %c0_21, %c0_22], %46 {strides = array<i32>} : memref<1x1x8xf32, #tpu.memory_space<vmem>>, vector<1x1x8xf32>,
    %47 = arith.cmpi eq, %arg0, %arg1 : i32
    %48 = arith.extui %47 : i1 to i32
    %cst_23 = arith.constant 1.000000e+01 : f32
    %c0_i32_24 = arith.constant 0 : i32
    %49 = arith.cmpi ne, %48, %c0_i32_24 : i32
    scf.if %49 {
      %61 = tpu.iota {dimensions = array<i32: 0>} : vector<8x8xi32>
      %62 = tpu.iota {dimensions = array<i32: 1>} : vector<8x8xi32>
      %63 = arith.cmpi eq, %61, %62 : vector<8x8xi32>
      %cst_34 = arith.constant 0.000000e+00 : f32
      %64 = vector.broadcast %cst_34 : f32 to vector<8x8xf32>
      %65 = arith.select %63, %26, %64 : vector<8x8xi1>, vector<8x8xf32>
      %cst_35 = arith.constant dense<0.000000e+00> : vector<8xf32>
      %66 = vector.multi_reduction <add>, %65, %cst_35 [1] : vector<8x8xf32> to vector<8xf32>
      %67 = vector.shape_cast %66 : vector<8xf32> to vector<8x1xf32>
      %68 = vector.broadcast %cst_23 : f32 to vector<8x1xf32>
      %69 = arith.mulf %67, %68 : vector<8x1xf32>
      %c0_36 = arith.constant 0 : index
      %c0_37 = arith.constant 0 : index
      %70 = vector.load %arg5[%c0_36, %c0_37] : memref<8x1xf32, #tpu.memory_space<vmem>>, vector<8x1xf32>
      tpu.vector_store %arg5[%c0_36, %c0_37], %69 {strides = array<i32>} : memref<8x1xf32, #tpu.memory_space<vmem>>, vector<8x1xf32>,
      %cst_38 = arith.constant dense<0.000000e+00> : vector<8xf32>
      %71 = vector.multi_reduction <add>, %65, %cst_38 [0] : vector<8x8xf32> to vector<8xf32>
      %72 = vector.shape_cast %71 : vector<8xf32> to vector<1x8xf32>
      %73 = vector.broadcast %cst_23 : f32 to vector<1x8xf32>
      %74 = arith.mulf %72, %73 : vector<1x8xf32>
      %75 = arith.index_cast %arg1 : i32 to index
      %c0_39 = arith.constant 0 : index
      %c0_40 = arith.constant 0 : index
      %76 = vector.load %arg8[%75, %c0_39, %c0_40] : memref<1x1x8xf32, #tpu.memory_space<vmem>>, vector<1x1x8xf32>
      %77 = vector.shape_cast %76 : vector<1x1x8xf32> to vector<1x8xf32>
      %78 = vector.shape_cast %74 : vector<1x8xf32> to vector<1x1x8xf32>
      tpu.vector_store %arg8[%75, %c0_39, %c0_40], %78 {strides = array<i32>} : memref<1x1x8xf32, #tpu.memory_space<vmem>>, vector<1x1x8xf32>,
      %cst_41 = arith.constant 0.000000e+00 : f32
      %79 = vector.broadcast %cst_41 : f32 to vector<8x8xf32>
      %80 = arith.select %63, %31, %79 : vector<8x8xi1>, vector<8x8xf32>
      %cst_42 = arith.constant dense<0.000000e+00> : vector<8xf32>
      %81 = vector.multi_reduction <add>, %80, %cst_42 [1] : vector<8x8xf32> to vector<8xf32>
      %82 = vector.shape_cast %81 : vector<8xf32> to vector<8x1xf32>
      %cst_43 = arith.constant dense<0.000000e+00> : vector<8xf32>
      %83 = vector.multi_reduction <add>, %80, %cst_43 [0] : vector<8x8xf32> to vector<8xf32>
      %84 = vector.shape_cast %83 : vector<8xf32> to vector<1x8xf32>
      %c0_44 = arith.constant 0 : index
      %c0_45 = arith.constant 0 : index
      %85 = vector.load %arg6[%c0_44, %c0_45] : memref<8x1xf32, #tpu.memory_space<vmem>>, vector<8x1xf32>
      %cst_46 = arith.constant 4.53999237E-5 : f32
      %86 = vector.broadcast %cst_46 : f32 to vector<8x1xf32>
      %87 = arith.subf %86, %82 : vector<8x1xf32>
      %88 = arith.addf %85, %87 : vector<8x1xf32>
      %c0_47 = arith.constant 0 : index
      %c0_48 = arith.constant 0 : index
      %89 = vector.load %arg6[%c0_47, %c0_48] : memref<8x1xf32, #tpu.memory_space<vmem>>, vector<8x1xf32>
      tpu.vector_store %arg6[%c0_47, %c0_48], %88 {strides = array<i32>} : memref<8x1xf32, #tpu.memory_space<vmem>>, vector<8x1xf32>,
      %90 = arith.index_cast %arg1 : i32 to index
      %c0_49 = arith.constant 0 : index
      %c0_50 = arith.constant 0 : index
      %91 = vector.load %arg7[%90, %c0_49, %c0_50] : memref<1x1x8xf32, #tpu.memory_space<vmem>>, vector<1x1x8xf32>
      %92 = vector.shape_cast %91 : vector<1x1x8xf32> to vector<1x8xf32>
      %cst_51 = arith.constant 4.53999237E-5 : f32
      %93 = vector.broadcast %cst_51 : f32 to vector<1x8xf32>
      %94 = arith.subf %93, %84 : vector<1x8xf32>
      %95 = arith.addf %92, %94 : vector<1x8xf32>
      %96 = arith.index_cast %arg1 : i32 to index
      %c0_52 = arith.constant 0 : index
      %c0_53 = arith.constant 0 : index
      %97 = vector.load %arg7[%96, %c0_52, %c0_53] : memref<1x1x8xf32, #tpu.memory_space<vmem>>, vector<1x1x8xf32>
      %98 = vector.shape_cast %97 : vector<1x1x8xf32> to vector<1x8xf32>
      %99 = vector.shape_cast %95 : vector<1x8xf32> to vector<1x1x8xf32>
      tpu.vector_store %arg7[%96, %c0_52, %c0_53], %99 {strides = array<i32>} : memref<1x1x8xf32, #tpu.memory_space<vmem>>, vector<1x1x8xf32>,
    } else {
    }
    %c0_i32_25 = arith.constant 0 : i32
    %50 = arith.cmpi eq, %arg1, %c0_i32_25 : i32
    %51 = arith.extui %50 : i1 to i32
    %cst_26 = arith.constant 1.000000e+01 : f32
    %c0_i32_27 = arith.constant 0 : i32
    %52 = arith.cmpi ne, %51, %c0_i32_27 : i32
    scf.if %52 {
      %c0_34 = arith.constant 0 : index
      %c0_35 = arith.constant 0 : index
      %61 = vector.load %arg5[%c0_34, %c0_35] : memref<8x1xf32, #tpu.memory_space<vmem>>, vector<8x1xf32>
      %62 = vector.broadcast %cst_26 : f32 to vector<8x1xf32>
      %63 = arith.subf %61, %62 : vector<8x1xf32>
      %64 = math.exp %63 : vector<8x1xf32>
      %c0_36 = arith.constant 0 : index
      %c0_37 = arith.constant 0 : index
      %65 = vector.load %arg6[%c0_36, %c0_37] : memref<8x1xf32, #tpu.memory_space<vmem>>, vector<8x1xf32>
      %66 = arith.addf %64, %65 : vector<8x1xf32>
      %67 = math.log %66 : vector<8x1xf32>
      %68 = vector.broadcast %cst_26 : f32 to vector<8x1xf32>
      %69 = arith.addf %68, %67 : vector<8x1xf32>
      %70 = arith.subf %69, %61 : vector<8x1xf32>
      %c0_38 = arith.constant 0 : index
      %c0_39 = arith.constant 0 : index
      %71 = vector.load %arg9[%c0_38, %c0_39] : memref<1x1xf32, #tpu.memory_space<vmem>>, vector<1x1xf32>
      %72 = vector.shape_cast %70 : vector<8x1xf32> to vector<1x8x1xf32>
      %cst_40 = arith.constant dense<0.000000e+00> : vector<1xf32>
      %73 = vector.multi_reduction <add>, %72, %cst_40 [1, 2] : vector<1x8x1xf32> to vector<1xf32>
      %74 = vector.shape_cast %73 : vector<1xf32> to vector<1x1x1xf32>
      %75 = vector.extract %74[0, 0, 0] : f32 from vector<1x1x1xf32>
      %76 = vector.broadcast %75 : f32 to vector<1x1xf32>
      %77 = arith.addf %71, %76 : vector<1x1xf32>
      %c0_41 = arith.constant 0 : index
      %c0_42 = arith.constant 0 : index
      %78 = vector.load %arg9[%c0_41, %c0_42] : memref<1x1xf32, #tpu.memory_space<vmem>>, vector<1x1xf32>
      tpu.vector_store %arg9[%c0_41, %c0_42], %77 {strides = array<i32>} : memref<1x1xf32, #tpu.memory_space<vmem>>, vector<1x1xf32>,
    } else {
    }
    %c0_i32_28 = arith.constant 0 : i32
    %53 = arith.cmpi eq, %arg0, %c0_i32_28 : i32
    %54 = arith.extui %53 : i1 to i32
    %cst_29 = arith.constant 1.000000e+01 : f32
    %c0_i32_30 = arith.constant 0 : i32
    %55 = arith.cmpi ne, %54, %c0_i32_30 : i32
    scf.if %55 {
      %61 = arith.index_cast %arg1 : i32 to index
      %c0_34 = arith.constant 0 : index
      %c0_35 = arith.constant 0 : index
      %62 = vector.load %arg8[%61, %c0_34, %c0_35] : memref<1x1x8xf32, #tpu.memory_space<vmem>>, vector<1x1x8xf32>
      %63 = vector.shape_cast %62 : vector<1x1x8xf32> to vector<1x8xf32>
      %64 = vector.broadcast %cst_29 : f32 to vector<1x8xf32>
      %65 = arith.subf %63, %64 : vector<1x8xf32>
      %66 = math.exp %65 : vector<1x8xf32>
      %67 = arith.index_cast %arg1 : i32 to index
      %c0_36 = arith.constant 0 : index
      %c0_37 = arith.constant 0 : index
      %68 = vector.load %arg7[%67, %c0_36, %c0_37] : memref<1x1x8xf32, #tpu.memory_space<vmem>>, vector<1x1x8xf32>
      %69 = vector.shape_cast %68 : vector<1x1x8xf32> to vector<1x8xf32>
      %70 = arith.addf %66, %69 : vector<1x8xf32>
      %71 = math.log %70 : vector<1x8xf32>
      %72 = vector.broadcast %cst_29 : f32 to vector<1x8xf32>
      %73 = arith.addf %72, %71 : vector<1x8xf32>
      %74 = arith.subf %73, %63 : vector<1x8xf32>
      %c0_38 = arith.constant 0 : index
      %c0_39 = arith.constant 0 : index
      %75 = vector.load %arg9[%c0_38, %c0_39] : memref<1x1xf32, #tpu.memory_space<vmem>>, vector<1x1xf32>
      %76 = vector.shape_cast %74 : vector<1x8xf32> to vector<1x1x8xf32>
      %cst_40 = arith.constant dense<0.000000e+00> : vector<1xf32>
      %77 = vector.multi_reduction <add>, %76, %cst_40 [1, 2] : vector<1x1x8xf32> to vector<1xf32>
      %78 = vector.shape_cast %77 : vector<1xf32> to vector<1x1x1xf32>
      %79 = vector.extract %78[0, 0, 0] : f32 from vector<1x1x1xf32>
      %80 = vector.broadcast %79 : f32 to vector<1x1xf32>
      %81 = arith.addf %75, %80 : vector<1x1xf32>
      %c0_41 = arith.constant 0 : index
      %c0_42 = arith.constant 0 : index
      %82 = vector.load %arg9[%c0_41, %c0_42] : memref<1x1xf32, #tpu.memory_space<vmem>>, vector<1x1xf32>
      tpu.vector_store %arg9[%c0_41, %c0_42], %81 {strides = array<i32>} : memref<1x1xf32, #tpu.memory_space<vmem>>, vector<1x1xf32>,
    } else {
    }
    %c0_i32_31 = arith.constant 0 : i32
    %56 = arith.cmpi eq, %arg0, %c0_i32_31 : i32
    %c0_i32_32 = arith.constant 0 : i32
    %57 = arith.cmpi eq, %arg1, %c0_i32_32 : i32
    %58 = arith.andi %56, %57 : i1
    %59 = arith.extui %58 : i1 to i32
    %c0_i32_33 = arith.constant 0 : i32
    %60 = arith.cmpi ne, %59, %c0_i32_33 : i32
    scf.if %60 {
      %c0_34 = arith.constant 0 : index
      %c0_35 = arith.constant 0 : index
      %61 = vector.load %arg9[%c0_34, %c0_35] : memref<1x1xf32, #tpu.memory_space<vmem>>, vector<1x1xf32>
      %cst_36 = arith.constant 6.250000e-02 : f32
      %62 = vector.broadcast %cst_36 : f32 to vector<1x1xf32>
      %63 = arith.mulf %61, %62 : vector<1x1xf32>
      %c0_37 = arith.constant 0 : index
      %c0_38 = arith.constant 0 : index
      %64 = vector.load %arg4[%c0_37, %c0_38] : memref<1x1xf32, #tpu.memory_space<vmem>>, vector<1x1xf32>
      tpu.vector_store %arg4[%c0_37, %c0_38], %63 {strides = array<i32>} : memref<1x1xf32, #tpu.memory_space<vmem>>, vector<1x1xf32>,
    } else {
    }
    return
  }
  func.func @transform_0(%arg0: i32, %arg1: i32) -> (i32, i32) {
    %c0_i32 = arith.constant 0 : i32
    %c0_i32_0 = arith.constant 0 : i32
    return %arg0, %c0_i32 : i32, i32
  }
  func.func @transform_1(%arg0: i32, %arg1: i32) -> (i32, i32) {
    %c0_i32 = arith.constant 0 : i32
    %c0_i32_0 = arith.constant 0 : i32
    return %arg1, %c0_i32 : i32, i32
  }
  func.func @transform_2(%arg0: i32, %arg1: i32) -> (i32, i32) {
    %c0_i32 = arith.constant 0 : i32
    %c0_i32_0 = arith.constant 0 : i32
    %c0_i32_1 = arith.constant 0 : i32
    return %c0_i32, %c0_i32_0 : i32, i32
  }
}

</mosaic_0001>

<llo_original>
// kernel: tpu_custom_call.1
$region0: #{tpu_custom_call.1}
  #allocation0 [shape = 'u32[]', space=smem, size = 0x4, offset = 0x4, fixed_abs, tag = 'smem constant byte address 0x4 - core index']
  #allocation1 [shape = 'u32[144,128]{1,0:T(1,128)}', space=vmem, size = 0x12000, scoped, tag = 'internal scratch']
  #allocation2 [shape = 'f32[8,1]{1,0:T(8,128)}', space=vmem, size = 0x1000, scoped, tag = 'scratch operand']
  #allocation3 [shape = 'f32[8,1]{1,0:T(8,128)}', space=vmem, size = 0x1000, scoped, tag = 'scratch operand']
  #allocation4 [shape = 'f32[1,1,8]{2,1,0:T(1,128)}', space=vmem, size = 0x200, scoped, tag = 'scratch operand']
  #allocation5 [shape = 'f32[1,1,8]{2,1,0:T(1,128)}', space=vmem, size = 0x200, scoped, tag = 'scratch operand']
  #allocation6 [shape = 'f32[1,1]{1,0:T(1,128)}', space=vmem, size = 0x200, scoped, tag = 'scratch operand']
  %s0 = inlined_call_operand.hbm [shape: f32[8,32], index: 0, kind: input, shape index: {}]
  %s1 = inlined_call_operand.hbm [shape: f32[8,32], index: 1, kind: input, shape index: {}]
  %s2 = inlined_call_operand.hbm [shape: f32[1,1], index: 2, kind: output, shape index: {}]
  %s3 = sld [smem:[#allocation0]]
  $region50: #{tpu_custom_call.1} parent=0
    _
  %s5 = ssub.s32 1, %s3
  %s6 = scalar_select 0, %s5, %s3
  $region1: #{tpu_custom_call.1} parent=0
    #allocation7 [shape = 'u8[4096]{0}', space=vmem, size = 0x1000, scoped, tag = 'input window, operand 0, single buffered']
    #allocation8 [shape = 's32[1]{0}', space=sflag, size = 0x4, scoped, tag = 'scoped memory for tpu_custom_call.1']
    #allocation9 [shape = 's32[1]{0}', space=sflag, size = 0x4, scoped, tag = 'scoped memory for tpu_custom_call.1']
    #allocation10 [shape = 'u8[4096]{0}', space=vmem, size = 0x1000, scoped, tag = 'input window, operand 1, single buffered']
    #allocation11 [shape = 's32[1]{0}', space=sflag, size = 0x4, scoped, tag = 'scoped memory for tpu_custom_call.1']
    #allocation12 [shape = 'u8[512]{0}', space=vmem, size = 0x400, scoped, tag = 'output window, operand 0, single buffered']
    %7 = vsyncpa [#allocation8], 0
    %8 = vsyncpa [#allocation11], 0
    %9 = vsyncpa [#allocation9], 0
    // Predicated region
    $region2: #{tpu_custom_call.1} parent=1 // pred_check
      _
    $region3: #{tpu_custom_call.1} parent=1 // pred_check_branch
      %11 = sbr.rel (0) target = $region5
    $region4: #{tpu_custom_call.1} parent=1 // pred_region
      %s13 = ssub.s32 128, 128
      %14 = vsyncadd [#allocation8], %s13
      %s16 = sshll.u32 [#allocation7], 4
      %s17 = int_to_ptr.vmem [resolvable:$true] %s16
      %19 = dma.hbm_to_vmem [thread:$0]  %s0, 128, %s17, [#allocation8]
    $region5: #{tpu_custom_call.1} parent=1 // pred_fallthru
      _
    // Predicated region
    $region6: #{tpu_custom_call.1} parent=1 // pred_check
      _
    $region7: #{tpu_custom_call.1} parent=1 // pred_check_branch
      %21 = sbr.rel (0) target = $region9
    $region8: #{tpu_custom_call.1} parent=1 // pred_region
      %s23 = ssub.s32 128, 128
      %24 = vsyncadd [#allocation11], %s23
      %s26 = sshll.u32 [#allocation10], 4
      %s27 = int_to_ptr.vmem [resolvable:$true] %s26
      %29 = dma.hbm_to_vmem [thread:$0]  %s1, 128, %s27, [#allocation11]
    $region9: #{tpu_custom_call.1} parent=1 // pred_fallthru
      _
    // Predicated region
    $region10: #{tpu_custom_call.1} parent=1 // pred_check
      _
    $region11: #{tpu_custom_call.1} parent=1 // pred_check_branch
      %31 = sbr.rel (0) target = $region13
    $region12: #{tpu_custom_call.1} parent=1 // pred_region
      %32 = dma.done [#allocation8], 128
    $region13: #{tpu_custom_call.1} parent=1 // pred_fallthru
      _
    // Predicated region
    $region14: #{tpu_custom_call.1} parent=1 // pred_check
      _
    $region15: #{tpu_custom_call.1} parent=1 // pred_check_branch
      %34 = sbr.rel (0) target = $region17
    $region16: #{tpu_custom_call.1} parent=1 // pred_region
      %35 = dma.done [#allocation11], 128
    $region17: #{tpu_custom_call.1} parent=1 // pred_fallthru
      _
    %p36 = scmp.eq.s32.totalorder 0, 0
    %p37 = scmp.eq.s32.totalorder 0, 0
    %p38 = pnand %p36, %p37
    %p39 = pneg %p38
    // Predicated region
    $region18: #{tpu_custom_call.1} parent=1 // pred_check
      _
    $region19: #{tpu_custom_call.1} parent=1 // pred_check_branch
      %41 = sbr.rel (%p38) target = $region21
    $region20: #{tpu_custom_call.1} parent=1 // pred_region
      %vm42 = vcmask 0
      %43 = vst.msk [vmem:[#allocation6] sm:$0x1] %vm42, 0.0
      %vm44 = vcmask 57344
      %45 = vst.msk [vmem:[#allocation4] sm:$0x1] %vm44, 0.0
    $region21: #{tpu_custom_call.1} parent=1 // pred_fallthru
      _
    // Predicated region
    $region22: #{tpu_custom_call.1} parent=1 // pred_check
      %p46 = pneg %p37
    $region23: #{tpu_custom_call.1} parent=1 // pred_check_branch
      %48 = sbr.rel (%p46) target = $region25
    $region24: #{tpu_custom_call.1} parent=1 // pred_region
      %vm49 = vcmask 7168
      %50 = vst.msk [vmem:[#allocation3] sm:$0xff] %vm49, 0.0
    $region25: #{tpu_custom_call.1} parent=1 // pred_fallthru
      _
    %v51 = vld [vmem:[#allocation7] sm:$0xff]
    %v52 = vld [vmem:[#allocation10] sm:$0xff]
    %v53 = vmul.f32 %v51, %v51
    %vm54 = vcmask 261120
    %v55 = vsel %vm54, %v53, 0.0
    %56 = vadd.xlane.f32.xlu0 %v55
    %v57 = vpop.xlane.xlu0 %56
    %v58 = vmax.f32 %v57, 1e-24
    %v59 = vrsqrt.pop %v58
    %v60 = vmul.f32 %v51, %v59
    %v61 = vmul.f32 %v52, %v52
    %v62 = vsel %vm54, %v61, 0.0
    %63 = vadd.xlane.f32.xlu0 %v62
    %v64 = vpop.xlane.xlu0 %63
    %v65 = vmax.f32 %v64, 1e-24
    %v66 = vrsqrt.pop %v65
    %v67 = vmul.f32 %v52, %v66
    %v69 = vsel %vm54, %v60, 0
    %v72 = vsel %vm54, %v67, 0
    %74 = vmatprep.subr.mxu0 0.0
    %75 = vmatpush1.xpose.msra.mxu0 0.0
    %76 = vmatprep.subr.mxu0 0.0
    %77 = vmatpush1.xpose.msra.mxu0 0.0
    %78 = vmatprep.subr.mxu0 0.0
    %79 = vmatpush1.xpose.msra.mxu0 0.0
    %80 = vmatprep.subr.mxu0 0.0
    %81 = vmatpush1.xpose.msra.mxu0 0.0
    %82 = vmatprep.subr.mxu0 0.0
    %83 = vmatpush1.xpose.msra.mxu0 0.0
    %84 = vmatprep.subr.mxu0 0.0
    %85 = vmatpush1.xpose.msra.mxu0 0.0
    %86 = vmatprep.subr.mxu0 0.0
    %87 = vmatpush1.xpose.msra.mxu0 0.0
    %88 = vmatprep.subr.mxu0 0.0
    %89 = vmatpush1.xpose.msra.mxu0 0.0
    %90 = vmatprep.subr.mxu0 0.0
    %91 = vmatpush1.xpose.msra.mxu0 0.0
    %92 = vmatprep.subr.mxu0 0.0
    %93 = vmatpush1.xpose.msra.mxu0 0.0
    %94 = vmatprep.subr.mxu0 0.0
    %95 = vmatpush1.xpose.msra.mxu0 0.0
    %96 = vmatprep.subr.mxu0 0.0
    %97 = vmatpush1.xpose.msra.mxu0 0.0
    %98 = vmatprep.subr.mxu0 0.0
    %99 = vmatpush1.xpose.msra.mxu0 0.0
    %100 = vmatprep.subr.mxu0 0.0
    %101 = vmatpush1.xpose.msra.mxu0 0.0
    %102 = vmatprep.subr.mxu0 0.0
    %103 = vmatpush1.xpose.msra.mxu0 0.0
    %104 = vmatprep.subr.mxu0 0.0
    %105 = vmatpush1.xpose.msra.mxu0 %v72
    %106 = vmatprep.subr.mxu0 0.0
    %107 = vmatpush2.xpose.msra.mxu0 0.0
    %108 = vmatprep.subr.mxu0 0.0
    %109 = vmatpush2.xpose.msra.mxu0 0.0
    %110 = vmatprep.subr.mxu0 0.0
    %111 = vmatpush2.xpose.msra.mxu0 0.0
    %112 = vmatprep.subr.mxu0 0.0
    %113 = vmatpush2.xpose.msra.mxu0 0.0
    %114 = vmatprep.subr.mxu0 0.0
    %115 = vmatpush2.xpose.msra.mxu0 0.0
    %116 = vmatprep.subr.mxu0 0.0
    %117 = vmatpush2.xpose.msra.mxu0 0.0
    %118 = vmatprep.subr.mxu0 0.0
    %119 = vmatpush2.xpose.msra.mxu0 0.0
    %120 = vmatprep.subr.mxu0 0.0
    %121 = vmatpush2.xpose.msra.mxu0 0.0
    %122 = vmatprep.subr.mxu0 0.0
    %123 = vmatpush2.xpose.msra.mxu0 0.0
    %124 = vmatprep.subr.mxu0 0.0
    %125 = vmatpush2.xpose.msra.mxu0 0.0
    %126 = vmatprep.subr.mxu0 0.0
    %127 = vmatpush2.xpose.msra.mxu0 0.0
    %128 = vmatprep.subr.mxu0 0.0
    %129 = vmatpush2.xpose.msra.mxu0 0.0
    %130 = vmatprep.subr.mxu0 0.0
    %131 = vmatpush2.xpose.msra.mxu0 0.0
    %132 = vmatprep.subr.mxu0 0.0
    %133 = vmatpush2.xpose.msra.mxu0 0.0
    %134 = vmatprep.subr.mxu0 0.0
    %135 = vmatpush2.xpose.msra.mxu0 0.0
    %136 = vmatprep.subr.mxu0 0.0
    %137 = vmatpush2.xpose.msra.mxu0 0.0
    %138 = vmatprep.mubr.f32.mxu0 0.0
    %139 = vmatmul.mubr.f32.gmra.mxu0 %v69
    %v140 = vpop.f32.mrf.mxu0
    %v141 = vadd.f32 0.0, %v140
    %v142 = vpop.f32.mrf.mxu0
    %143 = vdwg.mxu0
    %v144 = vmul.f32 %v141, 10.0
    %v145 = vsub.f32 %v144, 10.0
    %v146 = vmul.f32 %v145, 1.442695
    %v147 = vpow.pop %v146
    %v148 = vld [vmem:[#allocation3] sm:$0xff]
    %vm149 = vcmask 64512
    %v150 = vsel %vm149, %v147, 0.0
    %151 = vadd.xlane.f32.xlu0 %v150
    %v152 = vpop.xlane.xlu0 %151
    %v153 = vadd.f32 %v148, %v152
    %vm154 = vcmask 7168
    %155 = vst.msk [vmem:[#allocation3] sm:$0xff] %vm154, %v153
    %v156 = vld [vmem:[#allocation4] sm:$0x1]
    %v157 = vrot.slane %v150, 4
    %v158 = vadd.f32 %v150, %v157
    %v159 = vrot.slane %v158, 2
    %v160 = vadd.f32 %v158, %v159
    %v161 = vrot.slane %v160, 1
    %v162 = vadd.f32 %v160, %v161
    %v163 = vadd.f32 %v156, %v162
    %vm164 = vcmask 57344
    %165 = vst.msk [vmem:[#allocation4] sm:$0x1] %vm164, %v163
    %p166 = scmp.eq.s32.totalorder 0, 0
    // Predicated region
    $region26: #{tpu_custom_call.1} parent=1 // pred_check
      %p167 = pneg %p166
    $region27: #{tpu_custom_call.1} parent=1 // pred_check_branch
      %169 = sbr.rel (%p167) target = $region29
    $region28: #{tpu_custom_call.1} parent=1 // pred_region
      %v170 = vlaneseq
      %v171 = vshrl.u32 %v170, 7
      %v172 = vlaneseq
      %v173 = vand.u32 %v172, 127
      %vm174 = vcmp.eq.s32.totalorder %v171, %v173
      %v175 = vsel %vm174, %v141, 0.0
      %v176 = vsel %vm149, %v175, 0.0
      %177 = vadd.xlane.f32.xlu0 %v176
      %v178 = vpop.xlane.xlu0 %177
      %v179 = vmul.f32 %v178, 10.0
      %180 = vst.msk [vmem:[#allocation2] sm:$0xff] %vm154, %v179
      %v181 = vrot.slane %v176, 4
      %v182 = vadd.f32 %v176, %v181
      %v183 = vrot.slane %v182, 2
      %v184 = vadd.f32 %v182, %v183
      %v185 = vrot.slane %v184, 1
      %v186 = vadd.f32 %v184, %v185
      %v187 = vmul.f32 %v186, 10.0
      %188 = vst.msk [vmem:[#allocation5] sm:$0x1] %vm164, %v187
      %v189 = vsel %vm174, %v147, 0.0
      %v190 = vsel %vm149, %v189, 0.0
      %191 = vadd.xlane.f32.xlu0 %v190
      %v192 = vpop.xlane.xlu0 %191
      %v193 = vrot.slane %v190, 4
      %v194 = vadd.f32 %v190, %v193
      %v195 = vrot.slane %v194, 2
      %v196 = vadd.f32 %v194, %v195
      %v197 = vrot.slane %v196, 1
      %v198 = vadd.f32 %v196, %v197
      %v199 = vld [vmem:[#allocation3] sm:$0xff]
      %v200 = vsub.f32 4.5399924e-05, %v192
      %v201 = vadd.f32 %v199, %v200
      %202 = vst.msk [vmem:[#allocation3] sm:$0xff] %vm154, %v201
      %v203 = vld [vmem:[#allocation4] sm:$0x1]
      %v204 = vsub.f32 4.5399924e-05, %v198
      %v205 = vadd.f32 %v203, %v204
      %206 = vst.msk [vmem:[#allocation4] sm:$0x1] %vm164, %v205
    $region29: #{tpu_custom_call.1} parent=1 // pred_fallthru
      _
    // Predicated region
    $region30: #{tpu_custom_call.1} parent=1 // pred_check
      %p207 = pneg %p37
    $region31: #{tpu_custom_call.1} parent=1 // pred_check_branch
      %209 = sbr.rel (%p207) target = $region33
    $region32: #{tpu_custom_call.1} parent=1 // pred_region
      %v210 = vld [vmem:[#allocation2] sm:$0xff]
      %v211 = vsub.f32 %v210, 10.0
      %v212 = vmul.f32 %v211, 1.442695
      %v213 = vpow.pop %v212
      %v214 = vld [vmem:[#allocation3] sm:$0xff]
      %v215 = vadd.f32 %v213, %v214
      %v216 = vlog2.pop %v215
      %v217 = vmul.f32 %v216, 0.6931472
      %v218 = vadd.f32 %v217, 10.0
      %v219 = vsub.f32 %v218, %v210
      %v220 = vld [vmem:[#allocation6] sm:$0x1]
      %v221 = vsel %vm154, %v219, 0.0
      %222 = vadd.xlane.f32.xlu0 %v221
      %v223 = vpop.xlane.xlu0 %222
      %v224 = vrot.slane %v223, 4
      %v225 = vadd.f32 %v223, %v224
      %v226 = vrot.slane %v225, 2
      %v227 = vadd.f32 %v225, %v226
      %v228 = vrot.slane %v227, 1
      %v229 = vadd.f32 %v227, %v228
      %s230 = vtos %v229
      %v231 = vstv %s230
      %v232 = vadd.f32 %v220, %v231
      %vm233 = vcmask 0
      %234 = vst.msk [vmem:[#allocation6] sm:$0x1] %vm233, %v232
    $region33: #{tpu_custom_call.1} parent=1 // pred_fallthru
      _
    // Predicated region
    $region34: #{tpu_custom_call.1} parent=1 // pred_check
      %p235 = pneg %p36
    $region35: #{tpu_custom_call.1} parent=1 // pred_check_branch
      %237 = sbr.rel (%p235) target = $region37
    $region36: #{tpu_custom_call.1} parent=1 // pred_region
      %v238 = vld [vmem:[#allocation5] sm:$0x1]
      %v239 = vsub.f32 %v238, 10.0
      %v240 = vmul.f32 %v239, 1.442695
      %v241 = vpow.pop %v240
      %v242 = vld [vmem:[#allocation4] sm:$0x1]
      %v243 = vadd.f32 %v241, %v242
      %v244 = vlog2.pop %v243
      %v245 = vmul.f32 %v244, 0.6931472
      %v246 = vadd.f32 %v245, 10.0
      %v247 = vsub.f32 %v246, %v238
      %v248 = vld [vmem:[#allocation6] sm:$0x1]
      %v249 = vsel %vm164, %v247, 0.0
      %250 = vadd.xlane.f32.xlu0 %v249
      %v251 = vpop.xlane.xlu0 %250
      %v252 = vrot.slane %v251, 4
      %v253 = vadd.f32 %v251, %v252
      %v254 = vrot.slane %v253, 2
      %v255 = vadd.f32 %v253, %v254
      %v256 = vrot.slane %v255, 1
      %v257 = vadd.f32 %v255, %v256
      %s258 = vtos %v257
      %v259 = vstv %s258
      %v260 = vadd.f32 %v248, %v259
      %vm261 = vcmask 0
      %262 = vst.msk [vmem:[#allocation6] sm:$0x1] %vm261, %v260
    $region37: #{tpu_custom_call.1} parent=1 // pred_fallthru
      _
    // Predicated region
    $region38: #{tpu_custom_call.1} parent=1 // pred_check
      _
    $region39: #{tpu_custom_call.1} parent=1 // pred_check_branch
      %264 = sbr.rel (%p38) target = $region41
    $region40: #{tpu_custom_call.1} parent=1 // pred_region
      %v265 = vld [vmem:[#allocation6] sm:$0x1]
      %v266 = vmul.f32 %v265, 0.0625
      %vm267 = vcmask 0
      %268 = vst.msk [vmem:[#allocation12] sm:$0x1] %vm267, %v266
    $region41: #{tpu_custom_call.1} parent=1 // pred_fallthru
      _
    // Predicated region
    $region42: #{tpu_custom_call.1} parent=1 // pred_check
      _
    $region43: #{tpu_custom_call.1} parent=1 // pred_check_branch
      %270 = sbr.rel (0) target = $region45
    $region44: #{tpu_custom_call.1} parent=1 // pred_region
      %s272 = ssub.s32 16, 16
      %273 = vsyncadd [#allocation9], %s272
      %s275 = sshll.u32 [#allocation12], 4
      %s276 = int_to_ptr.vmem [resolvable:$true] %s275
      %278 = dma.vmem_to_hbm [thread:$0]  %s276, 16, %s2, [#allocation9]
    $region45: #{tpu_custom_call.1} parent=1 // pred_fallthru
      _
    // Predicated region
    $region46: #{tpu_custom_call.1} parent=1 // pred_check
      _
    $region47: #{tpu_custom_call.1} parent=1 // pred_check_branch
      %280 = sbr.rel (0) target = $region49
    $region48: #{tpu_custom_call.1} parent=1 // pred_region
      %281 = dma.done [#allocation9], 16
    $region49: #{tpu_custom_call.1} parent=1 // pred_fallthru
      _
    %282 = vsyncpa [#allocation8], 1
    %283 = vsyncpa [#allocation11], 1
    %284 = vsyncpa [#allocation9], 1

</llo_original>
